<compile_context>
chip_gen: v7x
topology: tpu7x:2x2x1
jax: 0.10.0
libtpu: 0.0.40
codegen_flags: <defaults>
</compile_context>

<pallas_src>
import functools

import jax
import jax.numpy as jnp
from jax import lax
from jax.experimental import pallas as pl
from jax.experimental.pallas import tpu as pltpu

ALPHA = 0.7
EPS = 1e-5
LANES = 128
SUBLANES = 8
NUM_SUMS = 6                      # [p*t, pt*t, p, pt, t, |p-pt|]
ACC_ROWS = NUM_SUMS * SUBLANES    # 48


def _partial_sums_kernel(p_ref, pt_ref, t_ref, acc_ref, *,
                         chunk, valid_rows_last, unroll):
    # p_ref / pt_ref / t_ref : (1, T, 128) VMEM tiles in native dtype.
    # acc_ref                : (1, 1, 48, 128) f32 block, resident across the
    #                          inner tile axis (accumulator pattern); rows
    #                          [8i, 8i+8) hold the per-lane partials of sum i.
    s = pl.program_id(1)          # tile-split axis ("parallel", v7x dual-TC)
    j = pl.program_id(2)          # tile axis within a split ("arbitrary")

    @pl.when(j == 0)
    def _():
        acc_ref[...] = jnp.zeros_like(acc_ref)

    t_rows = p_ref.shape[1]

    # Partial final tile (static: valid_rows_last is a Python int): zero the
    # stale rows of the freshly-DMA'd input buffers so padding rows contribute
    # 0 to every sum.  Costs nothing on the full tiles.
    if valid_rows_last is not None:
        is_last = jnp.logical_and(s == pl.num_programs(1) - 1,
                                  j == pl.num_programs(2) - 1)

        @pl.when(is_last)
        def _():
            pad = t_rows - valid_rows_last
            for r in (p_ref, pt_ref, t_ref):
                r[0, valid_rows_last:, :] = jnp.zeros((pad, LANES), r.dtype)

    n_chunks = t_rows // chunk

    def fold(x):
        # (chunk, 128) -> (8, 128): sublane-aligned VALU adds, explicit f32
        # accumulation (exact for f32 inputs; bf16 math stays packed).
        return jnp.sum(x.reshape(chunk // SUBLANES, SUBLANES, LANES),
                       axis=0, dtype=jnp.float32)

    def body(c, carry):
        off = pl.multiple_of(c * chunk, chunk)
        p = p_ref[0, pl.ds(off, chunk), :]
        pt = pt_ref[0, pl.ds(off, chunk), :]
        t = t_ref[0, pl.ds(off, chunk), :]
        return (carry[0] + fold(p * t),            # true_pos(pred)
                carry[1] + fold(pt * t),           # true_pos(pred_temp)
                carry[2] + fold(p),                # sum(pred)
                carry[3] + fold(pt),               # sum(pred_temp)
                carry[4] + fold(t),                # sum(target)
                carry[5] + fold(jnp.abs(p - pt)))  # similarity numerator

    init = tuple(jnp.zeros((SUBLANES, LANES), jnp.float32)
                 for _ in range(NUM_SUMS))
    sums = lax.fori_loop(0, n_chunks, body, init,
                         unroll=max(1, min(unroll, n_chunks)))

    # Direct static-slice accumulation (no concat temp, no [None] reshape).
    for i in range(NUM_SUMS):
        acc_ref[0, 0, i * SUBLANES:(i + 1) * SUBLANES, :] += sums[i]


def _pack_rows(dtype):
    # Native sublane packing: 8 rows/vreg for 4-byte, 16 for 2-byte, 32 for 1-byte.
    return max(SUBLANES, 32 // jnp.dtype(dtype).itemsize)


@functools.partial(jax.jit, static_argnames=("tile_rows", "chunk_rows"))
def dice_loss(pred, pred_temp, target, *, tile_rows=1024, chunk_rows=128):
    """pred, pred_temp: (B, 1, C, H, W); target: (B, C, H, W). Returns scalar loss."""
    # torch glue: pred.squeeze(dim=1); target.cuda() is a device no-op here.
    pred = jnp.squeeze(pred, axis=1)
    pred_temp = jnp.squeeze(pred_temp, axis=1)

    B = pred.shape[0]
    n_elems = 1
    for d in pred.shape[1:]:
        n_elems *= d

    pack = max(_pack_rows(pred.dtype), _pack_rows(pred_temp.dtype),
               _pack_rows(target.dtype))

    # Lane-dense view: (B, rows, 128).  The reshape is free; a pad copy only
    # triggers when n_elems is not a multiple of 128.
    rows = pl.cdiv(n_elems, LANES)

    def to_lanes(x):
        flat = x.reshape(B, -1)
        lane_pad = rows * LANES - n_elems
        if lane_pad:
            flat = jnp.pad(flat, ((0, 0), (0, lane_pad)))  # zeros are neutral
        return flat.reshape(B, rows, LANES)

    p2, pt2, tg2 = to_lanes(pred), to_lanes(pred_temp), to_lanes(target)

    # Tile rows: multiple of the dtype packing; no row padding — the partial
    # final tile (if any) is masked inside the kernel.
    t_rows = min(tile_rows, rows)
    t_rows = max(pack, (t_rows // pack) * pack)

    chunk = min(chunk_rows, t_rows)
    chunk = max(pack, (chunk // pack) * pack)
    while t_rows % chunk:
        chunk -= pack                      # terminates: pack divides t_rows

    n_tiles = pl.cdiv(rows, t_rows)
    last_rows = rows - (n_tiles - 1) * t_rows
    valid_rows_last = None if last_rows == t_rows else last_rows

    # Second "parallel" split of the tile loop so both v7x TensorCores stream
    # HBM even when B == 1 (neutral on single-TC chips).
    n_splits = 2 if (n_tiles % 2 == 0 and n_tiles >= 2) else 1
    tiles_per_split = n_tiles // n_splits

    in_spec = pl.BlockSpec(
        (1, t_rows, LANES), lambda b, s, j: (b, s * tiles_per_split + j, 0))
    out_spec = pl.BlockSpec(
        (1, 1, ACC_ROWS, LANES), lambda b, s, j: (b, s, 0, 0))

    kernel = functools.partial(
        _partial_sums_kernel, chunk=chunk, valid_rows_last=valid_rows_last,
        unroll=2)

    # Raise the scoped-VMEM limit only when big tiles actually need it
    # (v5e default is 16 MiB); leave the default otherwise.
    in_bytes_per_step = (t_rows * LANES *
                         sum(jnp.dtype(x.dtype).itemsize for x in (p2, pt2, tg2)))
    vmem_needed = 2 * in_bytes_per_step + 2 * ACC_ROWS * LANES * 4 + (1 << 20)
    vmem_limit = (min(64 * 1024 * 1024, 2 * vmem_needed)
                  if vmem_needed > 12 * 1024 * 1024 else None)

    bytes_accessed = (sum(x.size * jnp.dtype(x.dtype).itemsize
                          for x in (p2, pt2, tg2))
                      + B * n_splits * ACC_ROWS * LANES * 4)
    cost = pl.CostEstimate(flops=8 * B * rows * LANES, transcendentals=0,
                           bytes_accessed=int(bytes_accessed))

    partials = pl.pallas_call(
        kernel,
        out_shape=jax.ShapeDtypeStruct(
            (B, n_splits, ACC_ROWS, LANES), jnp.float32),
        grid=(B, n_splits, tiles_per_split),
        in_specs=[in_spec, in_spec, in_spec],
        out_specs=out_spec,
        compiler_params=pltpu.CompilerParams(
            dimension_semantics=("parallel", "parallel", "arbitrary"),
            vmem_limit_bytes=vmem_limit),
        cost_estimate=cost,
    )(p2, pt2, tg2)

    # Single tiny cross-lane reduction + all scalar math outside the hot kernel.
    sums = jnp.sum(
        partials.reshape(B, n_splits, NUM_SUMS, SUBLANES * LANES),
        axis=(1, 3))                                   # (B, 6)
    tp_p, tp_pt, s_p, s_pt, s_t, abs_sum = (sums[:, i] for i in range(NUM_SUMS))

    def tversky(tp, s_pred):
        false_neg = s_t - tp
        false_pos = s_pred - tp
        return (tp + EPS) / (tp + ALPHA * false_neg + (1.0 - ALPHA) * false_pos + EPS)

    dice = tversky(tp_p, s_p)
    dice_temp = tversky(tp_pt, s_pt)
    similarity_loss = jnp.sum(abs_sum) / jnp.float32(B * n_elems)
    return (
        jnp.mean((1.0 - dice) * 0.5 + (1.0 - dice_temp) * 0.4)
        + similarity_loss * 0.5
    )


def dice_loss_ref(pred, pred_temp, target):
    """Pure-JAX reference matching the PyTorch module exactly."""
    pred = jnp.squeeze(pred, axis=1).astype(jnp.float32)
    pred_temp = jnp.squeeze(pred_temp, axis=1).astype(jnp.float32)
    target = target.astype(jnp.float32)

    sim_loss = jnp.mean(jnp.abs(pred - pred_temp))

    def tversky(pr, tg):
        tp = jnp.sum(pr * tg, axis=(1, 2, 3))
        fn = jnp.sum(tg * (1.0 - pr), axis=(1, 2, 3))
        fp = jnp.sum((1.0 - tg) * pr, axis=(1, 2, 3))
        return (tp + EPS) / (tp + ALPHA * fn + (1.0 - ALPHA) * fp + EPS)

    dice = tversky(pred, target)
    dice_temp = tversky(pred_temp, target)
    return jnp.mean((1.0 - dice) * 0.5 + (1.0 - dice_temp) * 0.4) + sim_loss * 0.5


if __name__ == "__main__":
    B, C, H, W = 2, 4, 16, 16
    key = jax.random.PRNGKey(0)
    k1, k2, k3 = jax.random.split(key, 3)

    # pred / pred_temp in [0, 1] like sigmoid outputs, with the singleton dim
    # the module squeezes; target is a binary mask.
    pred = jax.random.uniform(k1, (B, 1, C, H, W), dtype=jnp.float32)
    pred_temp = jax.random.uniform(k2, (B, 1, C, H, W), dtype=jnp.float32)
    target = (jax.random.uniform(k3, (B, C, H, W)) > 0.5).astype(jnp.float32)

    loss = jax.block_until_ready(dice_loss(pred, pred_temp, target))
    loss_ref = jax.block_until_ready(dice_loss_ref(pred, pred_temp, target))

    assert jnp.allclose(loss, loss_ref, rtol=1e-5, atol=1e-6), (loss, loss_ref)
    print("KERNEL_OK")
</pallas_src>

<mosaic_0001>
module attributes {stable_mosaic.version = 11 : i64} {
  func.func @_partial_sums_kernel(%arg0: i32, %arg1: i32, %arg2: i32, %arg3: memref<1x8x128xf32, #tpu.memory_space<vmem>>, %arg4: memref<1x8x128xf32, #tpu.memory_space<vmem>>, %arg5: memref<1x8x128xf32, #tpu.memory_space<vmem>>, %arg6: memref<1x1x48x128xf32, #tpu.memory_space<vmem>>) attributes {dimension_semantics = [#tpu.dimension_semantics<parallel>, #tpu.dimension_semantics<parallel>, #tpu.dimension_semantics<arbitrary>], iteration_bounds = array<i64: 2, 1, 1>, scalar_prefetch = 0 : i64, scratch_operands = 0 : i64, tpu.core_type = #tpu.core_type<tc>, window_params = [{transform_indices = @transform_0, window_bounds = array<i64: 1, 8, 128>}, {transform_indices = @transform_1, window_bounds = array<i64: 1, 8, 128>}, {transform_indices = @transform_2, window_bounds = array<i64: 1, 8, 128>}, {transform_indices = @transform_3, window_bounds = array<i64: 1, 1, 48, 128>}]} {
    %c0_i32 = arith.constant 0 : i32
    %0 = arith.cmpi eq, %arg2, %c0_i32 : i32
    %1 = arith.extui %0 : i1 to i32
    %c0_i32_0 = arith.constant 0 : i32
    %2 = arith.cmpi ne, %1, %c0_i32_0 : i32
    scf.if %2 {
      %cst_61 = arith.constant 0.000000e+00 : f32
      %78 = vector.broadcast %cst_61 : f32 to vector<1x1x48x128xf32>
      %c0_62 = arith.constant 0 : index
      %c0_63 = arith.constant 0 : index
      %c0_64 = arith.constant 0 : index
      %c0_65 = arith.constant 0 : index
      %79 = vector.load %arg6[%c0_62, %c0_63, %c0_64, %c0_65] : memref<1x1x48x128xf32, #tpu.memory_space<vmem>>, vector<1x1x48x128xf32>
      tpu.vector_store %arg6[%c0_62, %c0_63, %c0_64, %c0_65], %78 {strides = array<i32>} : memref<1x1x48x128xf32, #tpu.memory_space<vmem>>, vector<1x1x48x128xf32>,
    } else {
    }
    %cst = arith.constant 0.000000e+00 : f32
    %3 = vector.broadcast %cst : f32 to vector<8x128xf32>
    %cst_1 = arith.constant 0.000000e+00 : f32
    %4 = vector.broadcast %cst_1 : f32 to vector<8x128xf32>
    %cst_2 = arith.constant 0.000000e+00 : f32
    %5 = vector.broadcast %cst_2 : f32 to vector<8x128xf32>
    %cst_3 = arith.constant 0.000000e+00 : f32
    %6 = vector.broadcast %cst_3 : f32 to vector<8x128xf32>
    %cst_4 = arith.constant 0.000000e+00 : f32
    %7 = vector.broadcast %cst_4 : f32 to vector<8x128xf32>
    %cst_5 = arith.constant 0.000000e+00 : f32
    %8 = vector.broadcast %cst_5 : f32 to vector<8x128xf32>
    %c0_i32_6 = arith.constant 0 : i32
    %c8_i32 = arith.constant 8 : i32
    %9 = arith.muli %c0_i32_6, %c8_i32 : i32
    %10 = tpu.assume_multiple %9, 8 : i32
    %c0 = arith.constant 0 : index
    %11 = arith.index_cast %10 : i32 to index
    %c0_7 = arith.constant 0 : index
    %12 = vector.load %arg3[%c0, %11, %c0_7] : memref<1x8x128xf32, #tpu.memory_space<vmem>>, vector<1x8x128xf32>
    %13 = vector.shape_cast %12 : vector<1x8x128xf32> to vector<8x128xf32>
    %c0_8 = arith.constant 0 : index
    %14 = arith.index_cast %10 : i32 to index
    %c0_9 = arith.constant 0 : index
    %15 = vector.load %arg4[%c0_8, %14, %c0_9] : memref<1x8x128xf32, #tpu.memory_space<vmem>>, vector<1x8x128xf32>
    %16 = vector.shape_cast %15 : vector<1x8x128xf32> to vector<8x128xf32>
    %c0_10 = arith.constant 0 : index
    %17 = arith.index_cast %10 : i32 to index
    %c0_11 = arith.constant 0 : index
    %18 = vector.load %arg5[%c0_10, %17, %c0_11] : memref<1x8x128xf32, #tpu.memory_space<vmem>>, vector<1x8x128xf32>
    %19 = vector.shape_cast %18 : vector<1x8x128xf32> to vector<8x128xf32>
    %20 = arith.mulf %13, %19 : vector<8x128xf32>
    %21 = vector.shape_cast %20 : vector<8x128xf32> to vector<1x8x128xf32>
    %cst_12 = arith.constant dense<0.000000e+00> : vector<8x128xf32>
    %22 = vector.multi_reduction <add>, %21, %cst_12 [0] : vector<1x8x128xf32> to vector<8x128xf32>
    %23 = arith.addf %3, %22 : vector<8x128xf32>
    %24 = arith.mulf %16, %19 : vector<8x128xf32>
    %25 = vector.shape_cast %24 : vector<8x128xf32> to vector<1x8x128xf32>
    %cst_13 = arith.constant dense<0.000000e+00> : vector<8x128xf32>
    %26 = vector.multi_reduction <add>, %25, %cst_13 [0] : vector<1x8x128xf32> to vector<8x128xf32>
    %27 = arith.addf %4, %26 : vector<8x128xf32>
    %28 = vector.shape_cast %13 : vector<8x128xf32> to vector<1x8x128xf32>
    %cst_14 = arith.constant dense<0.000000e+00> : vector<8x128xf32>
    %29 = vector.multi_reduction <add>, %28, %cst_14 [0] : vector<1x8x128xf32> to vector<8x128xf32>
    %30 = arith.addf %5, %29 : vector<8x128xf32>
    %31 = vector.shape_cast %16 : vector<8x128xf32> to vector<1x8x128xf32>
    %cst_15 = arith.constant dense<0.000000e+00> : vector<8x128xf32>
    %32 = vector.multi_reduction <add>, %31, %cst_15 [0] : vector<1x8x128xf32> to vector<8x128xf32>
    %33 = arith.addf %6, %32 : vector<8x128xf32>
    %34 = vector.shape_cast %19 : vector<8x128xf32> to vector<1x8x128xf32>
    %cst_16 = arith.constant dense<0.000000e+00> : vector<8x128xf32>
    %35 = vector.multi_reduction <add>, %34, %cst_16 [0] : vector<1x8x128xf32> to vector<8x128xf32>
    %36 = arith.addf %7, %35 : vector<8x128xf32>
    %37 = arith.subf %13, %16 : vector<8x128xf32>
    %38 = math.absf %37 : vector<8x128xf32>
    %39 = vector.shape_cast %38 : vector<8x128xf32> to vector<1x8x128xf32>
    %cst_17 = arith.constant dense<0.000000e+00> : vector<8x128xf32>
    %40 = vector.multi_reduction <add>, %39, %cst_17 [0] : vector<1x8x128xf32> to vector<8x128xf32>
    %41 = arith.addf %8, %40 : vector<8x128xf32>
    %c1_i32 = arith.constant 1 : i32
    %c0_18 = arith.constant 0 : index
    %c0_19 = arith.constant 0 : index
    %c0_20 = arith.constant 0 : index
    %c0_21 = arith.constant 0 : index
    %42 = vector.load %arg6[%c0_18, %c0_19, %c0_20, %c0_21] : memref<1x1x48x128xf32, #tpu.memory_space<vmem>>, vector<1x1x8x128xf32>
    %43 = vector.shape_cast %42 : vector<1x1x8x128xf32> to vector<8x128xf32>
    %44 = arith.addf %43, %23 : vector<8x128xf32>
    %c0_22 = arith.constant 0 : index
    %c0_23 = arith.constant 0 : index
    %c0_24 = arith.constant 0 : index
    %c0_25 = arith.constant 0 : index
    %45 = vector.load %arg6[%c0_22, %c0_23, %c0_24, %c0_25] : memref<1x1x48x128xf32, #tpu.memory_space<vmem>>, vector<1x1x8x128xf32>
    %46 = vector.shape_cast %45 : vector<1x1x8x128xf32> to vector<8x128xf32>
    %47 = vector.shape_cast %44 : vector<8x128xf32> to vector<1x1x8x128xf32>
    tpu.vector_store %arg6[%c0_22, %c0_23, %c0_24, %c0_25], %47 {strides = array<i32>} : memref<1x1x48x128xf32, #tpu.memory_space<vmem>>, vector<1x1x8x128xf32>,
    %c0_26 = arith.constant 0 : index
    %c0_27 = arith.constant 0 : index
    %c8 = arith.constant 8 : index
    %c0_28 = arith.constant 0 : index
    %48 = vector.load %arg6[%c0_26, %c0_27, %c8, %c0_28] : memref<1x1x48x128xf32, #tpu.memory_space<vmem>>, vector<1x1x8x128xf32>
    %49 = vector.shape_cast %48 : vector<1x1x8x128xf32> to vector<8x128xf32>
    %50 = arith.addf %49, %27 : vector<8x128xf32>
    %c0_29 = arith.constant 0 : index
    %c0_30 = arith.constant 0 : index
    %c8_31 = arith.constant 8 : index
    %c0_32 = arith.constant 0 : index
    %51 = vector.load %arg6[%c0_29, %c0_30, %c8_31, %c0_32] : memref<1x1x48x128xf32, #tpu.memory_space<vmem>>, vector<1x1x8x128xf32>
    %52 = vector.shape_cast %51 : vector<1x1x8x128xf32> to vector<8x128xf32>
    %53 = vector.shape_cast %50 : vector<8x128xf32> to vector<1x1x8x128xf32>
    tpu.vector_store %arg6[%c0_29, %c0_30, %c8_31, %c0_32], %53 {strides = array<i32>} : memref<1x1x48x128xf32, #tpu.memory_space<vmem>>, vector<1x1x8x128xf32>,
    %c0_33 = arith.constant 0 : index
    %c0_34 = arith.constant 0 : index
    %c16 = arith.constant 16 : index
    %c0_35 = arith.constant 0 : index
    %54 = vector.load %arg6[%c0_33, %c0_34, %c16, %c0_35] : memref<1x1x48x128xf32, #tpu.memory_space<vmem>>, vector<1x1x8x128xf32>
    %55 = vector.shape_cast %54 : vector<1x1x8x128xf32> to vector<8x128xf32>
    %56 = arith.addf %55, %30 : vector<8x128xf32>
    %c0_36 = arith.constant 0 : index
    %c0_37 = arith.constant 0 : index
    %c16_38 = arith.constant 16 : index
    %c0_39 = arith.constant 0 : index
    %57 = vector.load %arg6[%c0_36, %c0_37, %c16_38, %c0_39] : memref<1x1x48x128xf32, #tpu.memory_space<vmem>>, vector<1x1x8x128xf32>
    %58 = vector.shape_cast %57 : vector<1x1x8x128xf32> to vector<8x128xf32>
    %59 = vector.shape_cast %56 : vector<8x128xf32> to vector<1x1x8x128xf32>
    tpu.vector_store %arg6[%c0_36, %c0_37, %c16_38, %c0_39], %59 {strides = array<i32>} : memref<1x1x48x128xf32, #tpu.memory_space<vmem>>, vector<1x1x8x128xf32>,
    %c0_40 = arith.constant 0 : index
    %c0_41 = arith.constant 0 : index
    %c24 = arith.constant 24 : index
    %c0_42 = arith.constant 0 : index
    %60 = vector.load %arg6[%c0_40, %c0_41, %c24, %c0_42] : memref<1x1x48x128xf32, #tpu.memory_space<vmem>>, vector<1x1x8x128xf32>
    %61 = vector.shape_cast %60 : vector<1x1x8x128xf32> to vector<8x128xf32>
    %62 = arith.addf %61, %33 : vector<8x128xf32>
    %c0_43 = arith.constant 0 : index
    %c0_44 = arith.constant 0 : index
    %c24_45 = arith.constant 24 : index
    %c0_46 = arith.constant 0 : index
    %63 = vector.load %arg6[%c0_43, %c0_44, %c24_45, %c0_46] : memref<1x1x48x128xf32, #tpu.memory_space<vmem>>, vector<1x1x8x128xf32>
    %64 = vector.shape_cast %63 : vector<1x1x8x128xf32> to vector<8x128xf32>
    %65 = vector.shape_cast %62 : vector<8x128xf32> to vector<1x1x8x128xf32>
    tpu.vector_store %arg6[%c0_43, %c0_44, %c24_45, %c0_46], %65 {strides = array<i32>} : memref<1x1x48x128xf32, #tpu.memory_space<vmem>>, vector<1x1x8x128xf32>,
    %c0_47 = arith.constant 0 : index
    %c0_48 = arith.constant 0 : index
    %c32 = arith.constant 32 : index
    %c0_49 = arith.constant 0 : index
    %66 = vector.load %arg6[%c0_47, %c0_48, %c32, %c0_49] : memref<1x1x48x128xf32, #tpu.memory_space<vmem>>, vector<1x1x8x128xf32>
    %67 = vector.shape_cast %66 : vector<1x1x8x128xf32> to vector<8x128xf32>
    %68 = arith.addf %67, %36 : vector<8x128xf32>
    %c0_50 = arith.constant 0 : index
    %c0_51 = arith.constant 0 : index
    %c32_52 = arith.constant 32 : index
    %c0_53 = arith.constant 0 : index
    %69 = vector.load %arg6[%c0_50, %c0_51, %c32_52, %c0_53] : memref<1x1x48x128xf32, #tpu.memory_space<vmem>>, vector<1x1x8x128xf32>
    %70 = vector.shape_cast %69 : vector<1x1x8x128xf32> to vector<8x128xf32>
    %71 = vector.shape_cast %68 : vector<8x128xf32> to vector<1x1x8x128xf32>
    tpu.vector_store %arg6[%c0_50, %c0_51, %c32_52, %c0_53], %71 {strides = array<i32>} : memref<1x1x48x128xf32, #tpu.memory_space<vmem>>, vector<1x1x8x128xf32>,
    %c0_54 = arith.constant 0 : index
    %c0_55 = arith.constant 0 : index
    %c40 = arith.constant 40 : index
    %c0_56 = arith.constant 0 : index
    %72 = vector.load %arg6[%c0_54, %c0_55, %c40, %c0_56] : memref<1x1x48x128xf32, #tpu.memory_space<vmem>>, vector<1x1x8x128xf32>
    %73 = vector.shape_cast %72 : vector<1x1x8x128xf32> to vector<8x128xf32>
    %74 = arith.addf %73, %41 : vector<8x128xf32>
    %c0_57 = arith.constant 0 : index
    %c0_58 = arith.constant 0 : index
    %c40_59 = arith.constant 40 : index
    %c0_60 = arith.constant 0 : index
    %75 = vector.load %arg6[%c0_57, %c0_58, %c40_59, %c0_60] : memref<1x1x48x128xf32, #tpu.memory_space<vmem>>, vector<1x1x8x128xf32>
    %76 = vector.shape_cast %75 : vector<1x1x8x128xf32> to vector<8x128xf32>
    %77 = vector.shape_cast %74 : vector<8x128xf32> to vector<1x1x8x128xf32>
    tpu.vector_store %arg6[%c0_57, %c0_58, %c40_59, %c0_60], %77 {strides = array<i32>} : memref<1x1x48x128xf32, #tpu.memory_space<vmem>>, vector<1x1x8x128xf32>,
    return
  }
  func.func @transform_0(%arg0: i32, %arg1: i32, %arg2: i32) -> (i32, i32, i32) {
    %c1_i32 = arith.constant 1 : i32
    %0 = arith.muli %arg1, %c1_i32 : i32
    %1 = arith.addi %0, %arg2 : i32
    %c0_i32 = arith.constant 0 : i32
    %c0_i32_0 = arith.constant 0 : i32
    return %arg0, %1, %c0_i32 : i32, i32, i32
  }
  func.func @transform_1(%arg0: i32, %arg1: i32, %arg2: i32) -> (i32, i32, i32) {
    %c1_i32 = arith.constant 1 : i32
    %0 = arith.muli %arg1, %c1_i32 : i32
    %1 = arith.addi %0, %arg2 : i32
    %c0_i32 = arith.constant 0 : i32
    %c0_i32_0 = arith.constant 0 : i32
    return %arg0, %1, %c0_i32 : i32, i32, i32
  }
  func.func @transform_2(%arg0: i32, %arg1: i32, %arg2: i32) -> (i32, i32, i32) {
    %c1_i32 = arith.constant 1 : i32
    %0 = arith.muli %arg1, %c1_i32 : i32
    %1 = arith.addi %0, %arg2 : i32
    %c0_i32 = arith.constant 0 : i32
    %c0_i32_0 = arith.constant 0 : i32
    return %arg0, %1, %c0_i32 : i32, i32, i32
  }
  func.func @transform_3(%arg0: i32, %arg1: i32, %arg2: i32) -> (i32, i32, i32, i32) {
    %c0_i32 = arith.constant 0 : i32
    %c0_i32_0 = arith.constant 0 : i32
    %c0_i32_1 = arith.constant 0 : i32
    return %arg0, %arg1, %c0_i32, %c0_i32_0 : i32, i32, i32, i32
  }
}

</mosaic_0001>

<llo_original>
// kernel: squeeze.9
$region0: #{squeeze.9}
  %s0 = inlined_call_operand.vmem [shape: f32[2,1,4,16,16], index: 0, kind: input, shape index: {}]
  %s1 = inlined_call_operand.vmem [shape: f32[2,8,128], index: 1, kind: output, shape index: {}]
  %v2 = vld [vmem:[%s0] ss:$8 sm:$0xf]
  %v3 = vld [vmem:[%s0] ss:$8 sm:$0xf0]
  %vm4 = vcmask 1047556
  %v5 = vsel %vm4, %v3, %v2
  %vm6 = vcmask 130048
  %7 = vst.msk [vmem:[%s1] sm:$0xff] %vm6, %v5
  %s8 = scalar_lea.vmem %s0, 64
  %v9 = vld [vmem:[%s8] ss:$8 sm:$0xf]
  %s10 = scalar_lea.vmem %s0, 64
  %v11 = vld [vmem:[%s10] ss:$8 sm:$0xf0]
  %vm12 = vcmask 1047556
  %v13 = vsel %vm12, %v11, %v9
  %vm14 = vcmask 130048
  %s15 = scalar_lea.vmem %s1, 8
  %16 = vst.msk [vmem:[%s15] sm:$0xff] %vm14, %v13
  %s17 = scalar_lea.vmem %s0, 7
  %v18 = vld [vmem:[%s17] ss:$8 sm:$0xf]
  %s19 = scalar_lea.vmem %s0, 7
  %v20 = vld [vmem:[%s19] ss:$8 sm:$0xf0]
  %vm21 = vcmask 1047556
  %v22 = vsel %vm21, %v20, %v18
  %23 = vrot.lane.b32.xlu0 %v22, 112
  %v24 = vpop.permute.xlu0 %23
  %vm25 = vcmask 1048448
  %26 = vst.msk [vmem:[%s1] sm:$0xff] %vm25, %v24
  %s27 = scalar_lea.vmem %s0, 71
  %v28 = vld [vmem:[%s27] ss:$8 sm:$0xf]
  %s29 = scalar_lea.vmem %s0, 71
  %v30 = vld [vmem:[%s29] ss:$8 sm:$0xf0]
  %vm31 = vcmask 1047556
  %v32 = vsel %vm31, %v30, %v28
  %33 = vrot.lane.b32.xlu0 %v32, 112
  %v34 = vpop.permute.xlu0 %33
  %vm35 = vcmask 1048448
  %s36 = scalar_lea.vmem %s1, 8
  %37 = vst.msk [vmem:[%s36] sm:$0xff] %vm35, %v34
  %s38 = scalar_lea.vmem %s0, 6
  %v39 = vld [vmem:[%s38] ss:$8 sm:$0xf]
  %s40 = scalar_lea.vmem %s0, 6
  %v41 = vld [vmem:[%s40] ss:$8 sm:$0xf0]
  %vm42 = vcmask 1047556
  %v43 = vsel %vm42, %v41, %v39
  %44 = vrot.lane.b32.xlu0 %v43, 96
  %v45 = vpop.permute.xlu0 %44
  %vm46 = vcmask 917248
  %47 = vst.msk [vmem:[%s1] sm:$0xff] %vm46, %v45
  %s48 = scalar_lea.vmem %s0, 70
  %v49 = vld [vmem:[%s48] ss:$8 sm:$0xf]
  %s50 = scalar_lea.vmem %s0, 70
  %v51 = vld [vmem:[%s50] ss:$8 sm:$0xf0]
  %vm52 = vcmask 1047556
  %v53 = vsel %vm52, %v51, %v49
  %54 = vrot.lane.b32.xlu0 %v53, 96
  %v55 = vpop.permute.xlu0 %54
  %vm56 = vcmask 917248
  %s57 = scalar_lea.vmem %s1, 8
  %58 = vst.msk [vmem:[%s57] sm:$0xff] %vm56, %v55
  %s59 = scalar_lea.vmem %s0, 5
  %v60 = vld [vmem:[%s59] ss:$8 sm:$0xf]
  %s61 = scalar_lea.vmem %s0, 5
  %v62 = vld [vmem:[%s61] ss:$8 sm:$0xf0]
  %vm63 = vcmask 1047556
  %v64 = vsel %vm63, %v62, %v60
  %65 = vrot.lane.b32.xlu0 %v64, 80
  %v66 = vpop.permute.xlu0 %65
  %vm67 = vcmask 786048
  %68 = vst.msk [vmem:[%s1] sm:$0xff] %vm67, %v66
  %s69 = scalar_lea.vmem %s0, 69
  %v70 = vld [vmem:[%s69] ss:$8 sm:$0xf]
  %s71 = scalar_lea.vmem %s0, 69
  %v72 = vld [vmem:[%s71] ss:$8 sm:$0xf0]
  %vm73 = vcmask 1047556
  %v74 = vsel %vm73, %v72, %v70
  %75 = vrot.lane.b32.xlu0 %v74, 80
  %v76 = vpop.permute.xlu0 %75
  %vm77 = vcmask 786048
  %s78 = scalar_lea.vmem %s1, 8
  %79 = vst.msk [vmem:[%s78] sm:$0xff] %vm77, %v76
  %s80 = scalar_lea.vmem %s0, 4
  %v81 = vld [vmem:[%s80] ss:$8 sm:$0xf]
  %s82 = scalar_lea.vmem %s0, 4
  %v83 = vld [vmem:[%s82] ss:$8 sm:$0xf0]
  %vm84 = vcmask 1047556
  %v85 = vsel %vm84, %v83, %v81
  %86 = vrot.lane.b32.xlu0 %v85, 64
  %v87 = vpop.permute.xlu0 %86
  %vm88 = vcmask 654848
  %89 = vst.msk [vmem:[%s1] sm:$0xff] %vm88, %v87
  %s90 = scalar_lea.vmem %s0, 68
  %v91 = vld [vmem:[%s90] ss:$8 sm:$0xf]
  %s92 = scalar_lea.vmem %s0, 68
  %v93 = vld [vmem:[%s92] ss:$8 sm:$0xf0]
  %vm94 = vcmask 1047556
  %v95 = vsel %vm94, %v93, %v91
  %96 = vrot.lane.b32.xlu0 %v95, 64
  %v97 = vpop.permute.xlu0 %96
  %vm98 = vcmask 654848
  %s99 = scalar_lea.vmem %s1, 8
  %100 = vst.msk [vmem:[%s99] sm:$0xff] %vm98, %v97
  %s101 = scalar_lea.vmem %s0, 3
  %v102 = vld [vmem:[%s101] ss:$8 sm:$0xf]
  %s103 = scalar_lea.vmem %s0, 3
  %v104 = vld [vmem:[%s103] ss:$8 sm:$0xf0]
  %vm105 = vcmask 1047556
  %v106 = vsel %vm105, %v104, %v102
  %107 = vrot.lane.b32.xlu0 %v106, 48
  %v108 = vpop.permute.xlu0 %107
  %vm109 = vcmask 523648
  %110 = vst.msk [vmem:[%s1] sm:$0xff] %vm109, %v108
  %s111 = scalar_lea.vmem %s0, 67
  %v112 = vld [vmem:[%s111] ss:$8 sm:$0xf]
  %s113 = scalar_lea.vmem %s0, 67
  %v114 = vld [vmem:[%s113] ss:$8 sm:$0xf0]
  %vm115 = vcmask 1047556
  %v116 = vsel %vm115, %v114, %v112
  %117 = vrot.lane.b32.xlu0 %v116, 48
  %v118 = vpop.permute.xlu0 %117
  %vm119 = vcmask 523648
  %s120 = scalar_lea.vmem %s1, 8
  %121 = vst.msk [vmem:[%s120] sm:$0xff] %vm119, %v118
  %s122 = scalar_lea.vmem %s0, 2
  %v123 = vld [vmem:[%s122] ss:$8 sm:$0xf]
  %s124 = scalar_lea.vmem %s0, 2
  %v125 = vld [vmem:[%s124] ss:$8 sm:$0xf0]
  %vm126 = vcmask 1047556
  %v127 = vsel %vm126, %v125, %v123
  %128 = vrot.lane.b32.xlu0 %v127, 32
  %v129 = vpop.permute.xlu0 %128
  %vm130 = vcmask 392448
  %131 = vst.msk [vmem:[%s1] sm:$0xff] %vm130, %v129
  %s132 = scalar_lea.vmem %s0, 66
  %v133 = vld [vmem:[%s132] ss:$8 sm:$0xf]
  %s134 = scalar_lea.vmem %s0, 66
  %v135 = vld [vmem:[%s134] ss:$8 sm:$0xf0]
  %vm136 = vcmask 1047556
  %v137 = vsel %vm136, %v135, %v133
  %138 = vrot.lane.b32.xlu0 %v137, 32
  %v139 = vpop.permute.xlu0 %138
  %vm140 = vcmask 392448
  %s141 = scalar_lea.vmem %s1, 8
  %142 = vst.msk [vmem:[%s141] sm:$0xff] %vm140, %v139
  %s143 = scalar_lea.vmem %s0, 1
  %v144 = vld [vmem:[%s143] ss:$8 sm:$0xf]
  %s145 = scalar_lea.vmem %s0, 1
  %v146 = vld [vmem:[%s145] ss:$8 sm:$0xf0]
  %vm147 = vcmask 1047556
  %v148 = vsel %vm147, %v146, %v144
  %149 = vrot.lane.b32.xlu0 %v148, 16
  %v150 = vpop.permute.xlu0 %149
  %vm151 = vcmask 261248
  %152 = vst.msk [vmem:[%s1] sm:$0xff] %vm151, %v150
  %s153 = scalar_lea.vmem %s0, 65
  %v154 = vld [vmem:[%s153] ss:$8 sm:$0xf]
  %s155 = scalar_lea.vmem %s0, 65
  %v156 = vld [vmem:[%s155] ss:$8 sm:$0xf0]
  %vm157 = vcmask 1047556
  %v158 = vsel %vm157, %v156, %v154
  %159 = vrot.lane.b32.xlu0 %v158, 16
  %v160 = vpop.permute.xlu0 %159
  %vm161 = vcmask 261248
  %s162 = scalar_lea.vmem %s1, 8
  %163 = vst.msk [vmem:[%s162] sm:$0xff] %vm161, %v160

// kernel: squeeze.8
$region0: #{squeeze.8}
  %s0 = inlined_call_operand.hbm [shape: f32[2,1,4,16,16], index: 0, kind: input, shape index: {}]
  %s1 = inlined_call_operand.vmem [shape: f32[2,8,128], index: 1, kind: output, shape index: {}]
  $region1: #{squeeze.8} parent=0
    #allocation0 [shape = 'u8[65536]{0}', space=vmem, size = 0x10000, scoped, tag = 'operand span for operand 0']
    #allocation1 [shape = 's32[1]{0}', space=sflag, size = 0x4, scoped, tag = 'scoped memory for squeeze.8']
    %2 = vsyncpa [#allocation1], 0
    %s4 = ssub.s32 2048, 2048
    %5 = vsyncadd [#allocation1], %s4
    %s7 = sshll.u32 [#allocation0], 4
    %s8 = int_to_ptr.vmem [resolvable:$true] %s7
    %10 = dma.hbm_to_vmem [thread:$0]  %s0, 2048, %s8, [#allocation1]
    %11 = dma.done [#allocation1], 2048
    %v12 = vld [vmem:[#allocation0] ss:$8 sm:$0xf]
    %v13 = vld [vmem:[#allocation0] ss:$8 sm:$0xf0]
    %vm14 = vcmask 1047556
    %v15 = vsel %vm14, %v13, %v12
    %vm16 = vcmask 130048
    %17 = vst.msk [vmem:[%s1] sm:$0xff] %vm16, %v15
    %s18 = scalar_lea.vmem [#allocation0], 64
    %v19 = vld [vmem:[%s18] ss:$8 sm:$0xf]
    %s20 = scalar_lea.vmem [#allocation0], 64
    %v21 = vld [vmem:[%s20] ss:$8 sm:$0xf0]
    %vm22 = vcmask 1047556
    %v23 = vsel %vm22, %v21, %v19
    %vm24 = vcmask 130048
    %s25 = scalar_lea.vmem %s1, 8
    %26 = vst.msk [vmem:[%s25] sm:$0xff] %vm24, %v23
    %s27 = scalar_lea.vmem [#allocation0], 7
    %v28 = vld [vmem:[%s27] ss:$8 sm:$0xf]
    %s29 = scalar_lea.vmem [#allocation0], 7
    %v30 = vld [vmem:[%s29] ss:$8 sm:$0xf0]
    %vm31 = vcmask 1047556
    %v32 = vsel %vm31, %v30, %v28
    %33 = vrot.lane.b32.xlu0 %v32, 112
    %v34 = vpop.permute.xlu0 %33
    %vm35 = vcmask 1048448
    %36 = vst.msk [vmem:[%s1] sm:$0xff] %vm35, %v34
    %s37 = scalar_lea.vmem [#allocation0], 71
    %v38 = vld [vmem:[%s37] ss:$8 sm:$0xf]
    %s39 = scalar_lea.vmem [#allocation0], 71
    %v40 = vld [vmem:[%s39] ss:$8 sm:$0xf0]
    %vm41 = vcmask 1047556
    %v42 = vsel %vm41, %v40, %v38
    %43 = vrot.lane.b32.xlu0 %v42, 112
    %v44 = vpop.permute.xlu0 %43
    %vm45 = vcmask 1048448
    %s46 = scalar_lea.vmem %s1, 8
    %47 = vst.msk [vmem:[%s46] sm:$0xff] %vm45, %v44
    %s48 = scalar_lea.vmem [#allocation0], 6
    %v49 = vld [vmem:[%s48] ss:$8 sm:$0xf]
    %s50 = scalar_lea.vmem [#allocation0], 6
    %v51 = vld [vmem:[%s50] ss:$8 sm:$0xf0]
    %vm52 = vcmask 1047556
    %v53 = vsel %vm52, %v51, %v49
    %54 = vrot.lane.b32.xlu0 %v53, 96
    %v55 = vpop.permute.xlu0 %54
    %vm56 = vcmask 917248
    %57 = vst.msk [vmem:[%s1] sm:$0xff] %vm56, %v55
    %s58 = scalar_lea.vmem [#allocation0], 70
    %v59 = vld [vmem:[%s58] ss:$8 sm:$0xf]
    %s60 = scalar_lea.vmem [#allocation0], 70
    %v61 = vld [vmem:[%s60] ss:$8 sm:$0xf0]
    %vm62 = vcmask 1047556
    %v63 = vsel %vm62, %v61, %v59
    %64 = vrot.lane.b32.xlu0 %v63, 96
    %v65 = vpop.permute.xlu0 %64
    %vm66 = vcmask 917248
    %s67 = scalar_lea.vmem %s1, 8
    %68 = vst.msk [vmem:[%s67] sm:$0xff] %vm66, %v65
    %s69 = scalar_lea.vmem [#allocation0], 5
    %v70 = vld [vmem:[%s69] ss:$8 sm:$0xf]
    %s71 = scalar_lea.vmem [#allocation0], 5
    %v72 = vld [vmem:[%s71] ss:$8 sm:$0xf0]
    %vm73 = vcmask 1047556
    %v74 = vsel %vm73, %v72, %v70
    %75 = vrot.lane.b32.xlu0 %v74, 80
    %v76 = vpop.permute.xlu0 %75
    %vm77 = vcmask 786048
    %78 = vst.msk [vmem:[%s1] sm:$0xff] %vm77, %v76
    %s79 = scalar_lea.vmem [#allocation0], 69
    %v80 = vld [vmem:[%s79] ss:$8 sm:$0xf]
    %s81 = scalar_lea.vmem [#allocation0], 69
    %v82 = vld [vmem:[%s81] ss:$8 sm:$0xf0]
    %vm83 = vcmask 1047556
    %v84 = vsel %vm83, %v82, %v80
    %85 = vrot.lane.b32.xlu0 %v84, 80
    %v86 = vpop.permute.xlu0 %85
    %vm87 = vcmask 786048
    %s88 = scalar_lea.vmem %s1, 8
    %89 = vst.msk [vmem:[%s88] sm:$0xff] %vm87, %v86
    %s90 = scalar_lea.vmem [#allocation0], 4
    %v91 = vld [vmem:[%s90] ss:$8 sm:$0xf]
    %s92 = scalar_lea.vmem [#allocation0], 4
    %v93 = vld [vmem:[%s92] ss:$8 sm:$0xf0]
    %vm94 = vcmask 1047556
    %v95 = vsel %vm94, %v93, %v91
    %96 = vrot.lane.b32.xlu0 %v95, 64
    %v97 = vpop.permute.xlu0 %96
    %vm98 = vcmask 654848
    %99 = vst.msk [vmem:[%s1] sm:$0xff] %vm98, %v97
    %s100 = scalar_lea.vmem [#allocation0], 68
    %v101 = vld [vmem:[%s100] ss:$8 sm:$0xf]
    %s102 = scalar_lea.vmem [#allocation0], 68
    %v103 = vld [vmem:[%s102] ss:$8 sm:$0xf0]
    %vm104 = vcmask 1047556
    %v105 = vsel %vm104, %v103, %v101
    %106 = vrot.lane.b32.xlu0 %v105, 64
    %v107 = vpop.permute.xlu0 %106
    %vm108 = vcmask 654848
    %s109 = scalar_lea.vmem %s1, 8
    %110 = vst.msk [vmem:[%s109] sm:$0xff] %vm108, %v107
    %s111 = scalar_lea.vmem [#allocation0], 3
    %v112 = vld [vmem:[%s111] ss:$8 sm:$0xf]
    %s113 = scalar_lea.vmem [#allocation0], 3
    %v114 = vld [vmem:[%s113] ss:$8 sm:$0xf0]
    %vm115 = vcmask 1047556
    %v116 = vsel %vm115, %v114, %v112
    %117 = vrot.lane.b32.xlu0 %v116, 48
    %v118 = vpop.permute.xlu0 %117
    %vm119 = vcmask 523648
    %120 = vst.msk [vmem:[%s1] sm:$0xff] %vm119, %v118
    %s121 = scalar_lea.vmem [#allocation0], 67
    %v122 = vld [vmem:[%s121] ss:$8 sm:$0xf]
    %s123 = scalar_lea.vmem [#allocation0], 67
    %v124 = vld [vmem:[%s123] ss:$8 sm:$0xf0]
    %vm125 = vcmask 1047556
    %v126 = vsel %vm125, %v124, %v122
    %127 = vrot.lane.b32.xlu0 %v126, 48
    %v128 = vpop.permute.xlu0 %127
    %vm129 = vcmask 523648
    %s130 = scalar_lea.vmem %s1, 8
    %131 = vst.msk [vmem:[%s130] sm:$0xff] %vm129, %v128
    %s132 = scalar_lea.vmem [#allocation0], 2
    %v133 = vld [vmem:[%s132] ss:$8 sm:$0xf]
    %s134 = scalar_lea.vmem [#allocation0], 2
    %v135 = vld [vmem:[%s134] ss:$8 sm:$0xf0]
    %vm136 = vcmask 1047556
    %v137 = vsel %vm136, %v135, %v133
    %138 = vrot.lane.b32.xlu0 %v137, 32
    %v139 = vpop.permute.xlu0 %138
    %vm140 = vcmask 392448
    %141 = vst.msk [vmem:[%s1] sm:$0xff] %vm140, %v139
    %s142 = scalar_lea.vmem [#allocation0], 66
    %v143 = vld [vmem:[%s142] ss:$8 sm:$0xf]
    %s144 = scalar_lea.vmem [#allocation0], 66
    %v145 = vld [vmem:[%s144] ss:$8 sm:$0xf0]
    %vm146 = vcmask 1047556
    %v147 = vsel %vm146, %v145, %v143
    %148 = vrot.lane.b32.xlu0 %v147, 32
    %v149 = vpop.permute.xlu0 %148
    %vm150 = vcmask 392448
    %s151 = scalar_lea.vmem %s1, 8
    %152 = vst.msk [vmem:[%s151] sm:$0xff] %vm150, %v149
    %s153 = scalar_lea.vmem [#allocation0], 1
    %v154 = vld [vmem:[%s153] ss:$8 sm:$0xf]
    %s155 = scalar_lea.vmem [#allocation0], 1
    %v156 = vld [vmem:[%s155] ss:$8 sm:$0xf0]
    %vm157 = vcmask 1047556
    %v158 = vsel %vm157, %v156, %v154
    %159 = vrot.lane.b32.xlu0 %v158, 16
    %v160 = vpop.permute.xlu0 %159
    %vm161 = vcmask 261248
    %162 = vst.msk [vmem:[%s1] sm:$0xff] %vm161, %v160
    %s163 = scalar_lea.vmem [#allocation0], 65
    %v164 = vld [vmem:[%s163] ss:$8 sm:$0xf]
    %s165 = scalar_lea.vmem [#allocation0], 65
    %v166 = vld [vmem:[%s165] ss:$8 sm:$0xf0]
    %vm167 = vcmask 1047556
    %v168 = vsel %vm167, %v166, %v164
    %169 = vrot.lane.b32.xlu0 %v168, 16
    %v170 = vpop.permute.xlu0 %169
    %vm171 = vcmask 261248
    %s172 = scalar_lea.vmem %s1, 8
    %173 = vst.msk [vmem:[%s172] sm:$0xff] %vm171, %v170
    %174 = vsyncpa [#allocation1], 1

// kernel: dice_loss.1
$region0: #{dice_loss.1}
  #allocation0 [shape = 'u32[]', space=smem, size = 0x4, offset = 0x4, fixed_abs, tag = 'smem constant byte address 0x4 - core index']
  #allocation1 [shape = 'u32[144,128]{1,0:T(1,128)}', space=vmem, size = 0x12000, scoped, tag = 'internal scratch']
  %s0 = inlined_call_operand.vmem [shape: f32[2,8,128], index: 0, kind: input, shape index: {}]
  %s1 = inlined_call_operand.vmem [shape: f32[2,8,128], index: 1, kind: input, shape index: {}]
  %s2 = inlined_call_operand.vmem [shape: f32[2,8,128], index: 2, kind: input, shape index: {}]
  %s3 = inlined_call_operand.vmem [shape: f32[2,1,48,128], index: 3, kind: output, shape index: {}]
  %s4 = sld [smem:[#allocation0]]
  $region49: #{dice_loss.1} parent=0
    _
  %s6 = ssub.s32 1, %s4
  %s7 = scalar_select 0, %s6, %s4
  loop: start=0, step=1, limit=4
  $region2: #{dice_loss.1} parent=0 // loop_pre_header
    _
  $region3: #{dice_loss.1} parent=0 // loop_header
    %s9 = sphi 0, %s13
    %p10 = scmp.ge.s32.totalorder %s9, 4
    %s16 = sphi 0, %s35
    %s17 = sphi 0, %s31
    %s18 = sphi 0, %s27
    %s19 = sphi 0, %s16
    %s20 = sphi 0, %s17
    %s21 = sphi 0, %s18
    %s22 = sphi 0, %s19
    %s23 = sphi 0, %s20
    %s24 = sphi 0, %s21
    %s42 = sphi 0, %s44
    %s45 = sphi 0, %s42
    %s46 = sphi 0, %s45
    %s62 = sphi 0, %s46
    %s72 = sphi 0, %s74
    %s75 = sphi 0, %s72
    %s76 = sphi 0, %s75
    %s92 = sphi 0, %s76
    %s102 = sphi 0, %s104
    %s105 = sphi 0, %s102
    %s106 = sphi 0, %s105
    %s122 = sphi 0, %s106
    %s130 = sphi 0, %s132
    %s133 = sphi 0, %s130
    %s134 = sphi 0, %s133
    %s150 = sphi 0, %s134
  $region4: #{dice_loss.1} parent=0 // loop_header_branch
    %12 = sbr.rel (%p10) target = $region8
  $region5: #{dice_loss.1} parent=0 // loop_body
    %s14 = ssub.s32 %s9, 1
    %s15 = ssub.s32 %s9, 2
    %s25 = sadd.s32 1, %s18
    %p26 = scmp.ge.s32.totalorder %s25, 1
    %s27 = scalar_select %p26, 0, %s25
    %s28 = sadd.s32 1, %s17
    %s29 = scalar_select %p26, %s28, %s17
    %p30 = scmp.ge.s32.totalorder %s29, 1
    %s31 = scalar_select %p30, 0, %s29
    %s32 = sadd.s32 1, %s16
    %s33 = scalar_select %p30, %s32, %s16
    %p34 = scmp.ge.s32.totalorder %s33, 2
    %s35 = scalar_select %p34, 0, %s33
    %s36 = sadd.s32 %s17, %s18
    %s37 = sadd.s32 %s31, %s27
    %s38 = ssub.s32 %s16, %s35
    %s39 = ssub.s32 %s36, %s37
    %s40 = sor.u32 %s38, %s39
    %p41 = scmp.eq.s32.totalorder %s40, 0
    %s43 = sadd.s32 %s42, 1
    %s44 = scalar_select %p41, %s42, %s43
    %p47 = pneg %p41
    %p48 = scmp.eq.s32.totalorder %s9, 1
    %p49 = por %p47, %p48
    %p50 = scmp.ne.s32.totalorder %s42, %s45
    %p51 = scmp.eq.s32.totalorder %s9, 0
    %p52 = por %p50, %p51
    %p53 = scmp.ne.s32.totalorder %s42, %s45
    %p54 = scmp.eq.s32.totalorder %s14, 1
    %p55 = por %p53, %p54
    %p56 = scmp.ne.s32.totalorder %s45, %s46
    %p57 = scmp.eq.s32.totalorder %s14, 0
    %p58 = por %p56, %p57
    %p59 = scmp.ne.s32.totalorder %s45, %s46
    %p60 = scmp.eq.s32.totalorder %s15, 1
    %p61 = por %p59, %p60
    %p63 = scmp.ne.s32.totalorder %s46, %s62
    %p64 = scmp.eq.s32.totalorder %s15, 0
    %p65 = por %p63, %p64
    %s66 = sadd.s32 %s17, %s18
    %s67 = sadd.s32 %s31, %s27
    %s68 = ssub.s32 %s16, %s35
    %s69 = ssub.s32 %s66, %s67
    %s70 = sor.u32 %s68, %s69
    %p71 = scmp.eq.s32.totalorder %s70, 0
    %s73 = sadd.s32 %s72, 1
    %s74 = scalar_select %p71, %s72, %s73
    %p77 = pneg %p71
    %p78 = scmp.eq.s32.totalorder %s9, 1
    %p79 = por %p77, %p78
    %p80 = scmp.ne.s32.totalorder %s72, %s75
    %p81 = scmp.eq.s32.totalorder %s9, 0
    %p82 = por %p80, %p81
    %p83 = scmp.ne.s32.totalorder %s72, %s75
    %p84 = scmp.eq.s32.totalorder %s14, 1
    %p85 = por %p83, %p84
    %p86 = scmp.ne.s32.totalorder %s75, %s76
    %p87 = scmp.eq.s32.totalorder %s14, 0
    %p88 = por %p86, %p87
    %p89 = scmp.ne.s32.totalorder %s75, %s76
    %p90 = scmp.eq.s32.totalorder %s15, 1
    %p91 = por %p89, %p90
    %p93 = scmp.ne.s32.totalorder %s76, %s92
    %p94 = scmp.eq.s32.totalorder %s15, 0
    %p95 = por %p93, %p94
    %s96 = sadd.s32 %s17, %s18
    %s97 = sadd.s32 %s31, %s27
    %s98 = ssub.s32 %s16, %s35
    %s99 = ssub.s32 %s96, %s97
    %s100 = sor.u32 %s98, %s99
    %p101 = scmp.eq.s32.totalorder %s100, 0
    %s103 = sadd.s32 %s102, 1
    %s104 = scalar_select %p101, %s102, %s103
    %p107 = pneg %p101
    %p108 = scmp.eq.s32.totalorder %s9, 1
    %p109 = por %p107, %p108
    %p110 = scmp.ne.s32.totalorder %s102, %s105
    %p111 = scmp.eq.s32.totalorder %s9, 0
    %p112 = por %p110, %p111
    %p113 = scmp.ne.s32.totalorder %s102, %s105
    %p114 = scmp.eq.s32.totalorder %s14, 1
    %p115 = por %p113, %p114
    %p116 = scmp.ne.s32.totalorder %s105, %s106
    %p117 = scmp.eq.s32.totalorder %s14, 0
    %p118 = por %p116, %p117
    %p119 = scmp.ne.s32.totalorder %s105, %s106
    %p120 = scmp.eq.s32.totalorder %s15, 1
    %p121 = por %p119, %p120
    %p123 = scmp.ne.s32.totalorder %s106, %s122
    %p124 = scmp.eq.s32.totalorder %s15, 0
    %p125 = por %p123, %p124
    %s126 = ssub.s32 %s16, %s35
    %s127 = ssub.s32 %s17, %s31
    %s128 = sor.u32 %s126, %s127
    %p129 = scmp.eq.s32.totalorder %s128, 0
    %s131 = sadd.s32 %s130, 1
    %s132 = scalar_select %p129, %s130, %s131
    %p135 = pneg %p129
    %p136 = scmp.eq.s32.totalorder %s9, 1
    %p137 = por %p135, %p136
    %p138 = scmp.ne.s32.totalorder %s130, %s133
    %p139 = scmp.eq.s32.totalorder %s9, 0
    %p140 = por %p138, %p139
    %p141 = scmp.ne.s32.totalorder %s130, %s133
    %p142 = scmp.eq.s32.totalorder %s14, 1
    %p143 = por %p141, %p142
    %p144 = scmp.ne.s32.totalorder %s133, %s134
    %p145 = scmp.eq.s32.totalorder %s14, 0
    %p146 = por %p144, %p145
    %p147 = scmp.ne.s32.totalorder %s133, %s134
    %p148 = scmp.eq.s32.totalorder %s15, 1
    %p149 = por %p147, %p148
    %p151 = scmp.ne.s32.totalorder %s134, %s150
    %p152 = scmp.eq.s32.totalorder %s15, 0
    %p153 = por %p151, %p152
    %p154 = scmp.le.s32.totalorder 1, %s9
    %p155 = scmp.lt.s32.totalorder %s9, 3
    %p156 = pnand %p154, %p155
    %p157 = pneg %p156
    // Predicated region
    $region9: #{dice_loss.1} parent=5 // pred_check
      _
    $region10: #{dice_loss.1} parent=5 // pred_check_branch
      %159 = sbr.rel (%p156) target = $region12
    $region11: #{dice_loss.1} parent=5 // pred_region
      %s160 = ssub.s32 %s9, 1
    $region12: #{dice_loss.1} parent=5 // pred_fallthru
      _
    %p161 = scmp.lt.s32.totalorder %s9, 2
    // Predicated region
    $region13: #{dice_loss.1} parent=5 // pred_check
      %p162 = pneg %p161
    $region14: #{dice_loss.1} parent=5 // pred_check_branch
      %164 = sbr.rel (%p162) target = $region16
    $region15: #{dice_loss.1} parent=5 // pred_region
      // Predicated region
      $region17: #{dice_loss.1} parent=15 // pred_check
        %p165 = pneg %p52
      $region18: #{dice_loss.1} parent=15 // pred_check_branch
        %167 = sbr.rel (%p165) target = $region20
      $region19: #{dice_loss.1} parent=15 // pred_region
        %s168 = sadd.s32 %s17, %s18
        %p169 = scmp.lt.s32.totalorder %s16, 1
        %s170 = scalar_select %p169, %s16, 1
        %p171 = scmp.lt.s32.totalorder %s168, 0
        %s172 = scalar_select %p171, %s168, 0
        %s173 = sadd.s32 %s172, %s170
        %s174 = smul.addr %s173, 8
        %s175 = scalar_lea.vmem %s0, %s174
        %s176 = sadd.s32 %s17, %s18
      $region20: #{dice_loss.1} parent=15 // pred_fallthru
        _
      // Predicated region
      $region21: #{dice_loss.1} parent=15 // pred_check
        %p177 = pneg %p82
      $region22: #{dice_loss.1} parent=15 // pred_check_branch
        %179 = sbr.rel (%p177) target = $region24
      $region23: #{dice_loss.1} parent=15 // pred_region
        %s180 = sadd.s32 %s17, %s18
        %p181 = scmp.lt.s32.totalorder %s16, 1
        %s182 = scalar_select %p181, %s16, 1
        %p183 = scmp.lt.s32.totalorder %s180, 0
        %s184 = scalar_select %p183, %s180, 0
        %s185 = sadd.s32 %s184, %s182
        %s186 = smul.addr %s185, 8
        %s187 = scalar_lea.vmem %s1, %s186
        %s188 = sadd.s32 %s17, %s18
      $region24: #{dice_loss.1} parent=15 // pred_fallthru
        _
      // Predicated region
      $region25: #{dice_loss.1} parent=15 // pred_check
        %p189 = pneg %p112
      $region26: #{dice_loss.1} parent=15 // pred_check_branch
        %191 = sbr.rel (%p189) target = $region28
      $region27: #{dice_loss.1} parent=15 // pred_region
        %s192 = sadd.s32 %s17, %s18
        %p193 = scmp.lt.s32.totalorder %s16, 1
        %s194 = scalar_select %p193, %s16, 1
        %p195 = scmp.lt.s32.totalorder %s192, 0
        %s196 = scalar_select %p195, %s192, 0
        %s197 = sadd.s32 %s196, %s194
        %s198 = smul.addr %s197, 8
        %s199 = scalar_lea.vmem %s2, %s198
        %s200 = sadd.s32 %s17, %s18
      $region28: #{dice_loss.1} parent=15 // pred_fallthru
        _
    $region16: #{dice_loss.1} parent=5 // pred_fallthru
      _
    %p201 = scmp.le.s32.totalorder 1, %s9
    %p202 = scmp.lt.s32.totalorder %s9, 3
    %p203 = pnand %p201, %p202
    %p204 = pneg %p203
    // Predicated region
    $region29: #{dice_loss.1} parent=5 // pred_check
      _
    $region30: #{dice_loss.1} parent=5 // pred_check_branch
      %206 = sbr.rel (%p203) target = $region32
    $region31: #{dice_loss.1} parent=5 // pred_region
      %s207 = ssub.s32 %s9, 1
      %s208 = sadd.s32 %s20, %s21
      %p209 = scmp.lt.s32.totalorder %s19, 1
      %s210 = scalar_select %p209, %s19, 1
      %p211 = scmp.lt.s32.totalorder %s208, 0
      %s212 = scalar_select %p211, %s208, 0
      %s213 = sadd.s32 %s212, %s210
      %s214 = smul.addr %s213, 8
      %s215 = scalar_lea.vmem %s0, %s214
      %p216 = pneg %p58
      %p217 = pneg %p55
      %s218 = sadd.s32 %s20, %s21
      %p219 = scmp.lt.s32.totalorder %s19, 1
      %s220 = scalar_select %p219, %s19, 1
      %p221 = scmp.lt.s32.totalorder %s218, 0
      %s222 = scalar_select %p221, %s218, 0
      %s223 = sadd.s32 %s222, %s220
      %s224 = smul.addr %s223, 8
      %s225 = scalar_lea.vmem %s1, %s224
      %p226 = pneg %p88
      %p227 = pneg %p85
      %s228 = sadd.s32 %s20, %s21
      %p229 = scmp.lt.s32.totalorder %s19, 1
      %s230 = scalar_select %p229, %s19, 1
      %p231 = scmp.lt.s32.totalorder %s228, 0
      %s232 = scalar_select %p231, %s228, 0
      %s233 = sadd.s32 %s232, %s230
      %s234 = smul.addr %s233, 8
      %s235 = scalar_lea.vmem %s2, %s234
      %p236 = pneg %p118
      %p237 = pneg %p115
      %p238 = pneg %p146
      %p239 = pneg %p143
      %p240 = scmp.lt.s32.totalorder %s19, 1
      %s241 = scalar_select %p240, %s19, 1
      %p242 = scmp.lt.s32.totalorder %s20, 0
      %s243 = scalar_select %p242, %s20, 0
      %s244 = smul.addr %s243, 6
      %s245 = smul.addr %s241, 6
      %s246 = sadd.s32 %s244, %s245
      %s247 = smul.addr %s246, 8
      %s248 = scalar_lea.vmem %s3, %s247
      %s249 = sadd.s32 %s20, %s21
      %p250 = scmp.lt.s32.totalorder %s19, 1
      %s251 = scalar_select %p250, %s19, 1
      %p252 = scmp.lt.s32.totalorder %s249, 0
      %s253 = scalar_select %p252, %s249, 0
      %s254 = sadd.s32 %s253, %s251
      %s255 = smul.addr %s254, 8
      %s256 = scalar_lea.vmem %s0, %s255
      %s257 = sadd.s32 %s20, %s21
      %s258 = sadd.s32 %s20, %s21
      %p259 = scmp.lt.s32.totalorder %s19, 1
      %s260 = scalar_select %p259, %s19, 1
      %p261 = scmp.lt.s32.totalorder %s258, 0
      %s262 = scalar_select %p261, %s258, 0
      %s263 = sadd.s32 %s262, %s260
      %s264 = smul.addr %s263, 8
      %s265 = scalar_lea.vmem %s1, %s264
      %s266 = sadd.s32 %s20, %s21
      %s267 = sadd.s32 %s20, %s21
      %p268 = scmp.lt.s32.totalorder %s19, 1
      %s269 = scalar_select %p268, %s19, 1
      %p270 = scmp.lt.s32.totalorder %s267, 0
      %s271 = scalar_select %p270, %s267, 0
      %s272 = sadd.s32 %s271, %s269
      %s273 = smul.addr %s272, 8
      %s274 = scalar_lea.vmem %s2, %s273
      %s275 = sadd.s32 %s20, %s21
      %p276 = scmp.lt.s32.totalorder %s19, 1
      %s277 = scalar_select %p276, %s19, 1
      %p278 = scmp.lt.s32.totalorder %s20, 0
      %s279 = scalar_select %p278, %s20, 0
      %s280 = smul.addr %s279, 6
      %s281 = smul.addr %s277, 6
      %s282 = sadd.s32 %s280, %s281
      %s283 = smul.addr %s282, 8
      %s284 = scalar_lea.vmem %s3, %s283
      %p285 = scmp.eq.s32.totalorder %s21, 0
      // Predicated region
      $region33: #{dice_loss.1} parent=31 // pred_check
        %p286 = pneg %p285
      $region34: #{dice_loss.1} parent=31 // pred_check_branch
        %288 = sbr.rel (%p286) target = $region36
      $region35: #{dice_loss.1} parent=31 // pred_region
        %289 = vst [vmem:[%s284] sm:$0xff] 0.0
        %290 = vst [vmem:[%s284 + $0x8] sm:$0xff] 0.0
        %291 = vst [vmem:[%s284 + $0x10] sm:$0xff] 0.0
        %292 = vst [vmem:[%s284 + $0x18] sm:$0xff] 0.0
        %293 = vst [vmem:[%s284 + $0x20] sm:$0xff] 0.0
        %294 = vst [vmem:[%s284 + $0x28] sm:$0xff] 0.0
      $region36: #{dice_loss.1} parent=31 // pred_fallthru
        _
      %v295 = vld [vmem:[%s256] sm:$0xff]
      %v296 = vld [vmem:[%s265] sm:$0xff]
      %v297 = vld [vmem:[%s274] sm:$0xff]
      %v298 = vmul.f32 %v295, %v297
      %v299 = vadd.f32 %v298, 0.0
      %v300 = vadd.f32 %v299, 0.0
      %v301 = vmul.f32 %v296, %v297
      %v302 = vadd.f32 %v301, 0.0
      %v303 = vadd.f32 %v302, 0.0
      %v304 = vadd.f32 %v295, 0.0
      %v305 = vadd.f32 %v304, 0.0
      %v306 = vadd.f32 %v296, 0.0
      %v307 = vadd.f32 %v306, 0.0
      %v308 = vadd.f32 %v297, 0.0
      %v309 = vadd.f32 %v308, 0.0
      %v310 = vsub.f32 %v295, %v296
      %v311 = vand.u32 2147483647, %v310
      %v312 = vadd.f32 %v311, 0.0
      %v313 = vadd.f32 %v312, 0.0
      %v314 = vld [vmem:[%s284] sm:$0xff]
      %v315 = vadd.f32 %v314, %v300
      %316 = vst [vmem:[%s284] sm:$0xff] %v315
      %v317 = vld [vmem:[%s284 + $0x8] sm:$0xff]
      %v318 = vadd.f32 %v317, %v303
      %319 = vst [vmem:[%s284 + $0x8] sm:$0xff] %v318
      %v320 = vld [vmem:[%s284 + $0x10] sm:$0xff]
      %v321 = vadd.f32 %v320, %v305
      %322 = vst [vmem:[%s284 + $0x10] sm:$0xff] %v321
      %v323 = vld [vmem:[%s284 + $0x18] sm:$0xff]
      %v324 = vadd.f32 %v323, %v307
      %325 = vst [vmem:[%s284 + $0x18] sm:$0xff] %v324
      %v326 = vld [vmem:[%s284 + $0x20] sm:$0xff]
      %v327 = vadd.f32 %v326, %v309
      %328 = vst [vmem:[%s284 + $0x20] sm:$0xff] %v327
      %v329 = vld [vmem:[%s284 + $0x28] sm:$0xff]
      %v330 = vadd.f32 %v329, %v313
      %331 = vst [vmem:[%s284 + $0x28] sm:$0xff] %v330
      %p332 = scmp.lt.s32.totalorder %s19, 1
      %s333 = scalar_select %p332, %s19, 1
      %p334 = scmp.lt.s32.totalorder %s20, 0
      %s335 = scalar_select %p334, %s20, 0
      %s336 = smul.addr %s335, 6
      %s337 = smul.addr %s333, 6
      %s338 = sadd.s32 %s336, %s337
      %s339 = smul.addr %s338, 8
      %s340 = scalar_lea.vmem %s3, %s339
      // Predicated region
      $region37: #{dice_loss.1} parent=31 // pred_check
        %p341 = pneg %p143
      $region38: #{dice_loss.1} parent=31 // pred_check_branch
        %343 = sbr.rel (%p341) target = $region40
      $region39: #{dice_loss.1} parent=31 // pred_region
        _
      $region40: #{dice_loss.1} parent=31 // pred_fallthru
        _
    $region32: #{dice_loss.1} parent=5 // pred_fallthru
      _
    %p344 = scmp.le.s32.totalorder 2, %s9
    // Predicated region
    $region41: #{dice_loss.1} parent=5 // pred_check
      %p345 = pneg %p344
    $region42: #{dice_loss.1} parent=5 // pred_check_branch
      %347 = sbr.rel (%p345) target = $region44
    $region43: #{dice_loss.1} parent=5 // pred_region
      %s348 = ssub.s32 %s9, 2
      // Predicated region
      $region45: #{dice_loss.1} parent=43 // pred_check
        %p349 = pneg %p149
      $region46: #{dice_loss.1} parent=43 // pred_check_branch
        %351 = sbr.rel (%p349) target = $region48
      $region47: #{dice_loss.1} parent=43 // pred_region
        %p352 = scmp.lt.s32.totalorder %s22, 1
        %s353 = scalar_select %p352, %s22, 1
        %p354 = scmp.lt.s32.totalorder %s23, 0
        %s355 = scalar_select %p354, %s23, 0
        %s356 = smul.addr %s355, 6
        %s357 = smul.addr %s353, 6
        %s358 = sadd.s32 %s356, %s357
        %s359 = smul.addr %s358, 8
        %s360 = scalar_lea.vmem %s3, %s359
      $region48: #{dice_loss.1} parent=43 // pred_fallthru
        _
    $region44: #{dice_loss.1} parent=5 // pred_fallthru
      _
  $region6: #{dice_loss.1} parent=0 // loop_footer
    %s13 = sadd.s32 1, %s9
  $region7: #{dice_loss.1} parent=0 // loop_footer_branch
    %8 = sbr.rel target = $region3
  $region8: #{dice_loss.1} parent=0 // loop_exit
    _

</llo_original>
